<compile_context>
chip_gen: v7x
topology: tpu7x:2x2x1
jax: 0.10.0
libtpu: 0.0.40
codegen_flags: <defaults>
</compile_context>

<pallas_src>
import jax
import jax.numpy as jnp
from jax.experimental import pallas as pl
from jax.experimental.pallas import tpu as pltpu

_LANE = 128
_SUBLANE = 8
_TARGET_TILE_BYTES = 4 * 1024 * 1024   # ~4 MiB per input buffer per pipeline stage
_VMEM_LIMIT_BYTES = 40 * 1024 * 1024   # 2 inputs x 2 buffers x 4 MiB = 16 MiB + headroom


def _num_tensorcores() -> int:
    """Best-effort TensorCores-per-device (2 on v7x, 1 on v5e/v6e). Safe default: 1."""
    try:
        info = pltpu.get_tpu_info()
        for name in ("num_cores", "core_count", "tensorcores_per_chip", "num_tensorcores"):
            v = getattr(info, name, None)
            if isinstance(v, int) and v > 0:
                return v
    except Exception:
        pass
    try:
        kind = jax.devices()[0].device_kind.lower()
        if "v7" in kind:
            return 2
    except Exception:
        pass
    return 1


def _l1_partial_kernel(x_ref, t_ref, acc_ref):
    """Accumulate sum(|x - t|) over this split's tiles into an (8,128) f32 accumulator."""
    @pl.when(pl.program_id(1) == 0)
    def _():
        acc_ref[...] = jnp.zeros_like(acc_ref)

    diff = jnp.abs(x_ref[...].astype(jnp.float32) - t_ref[...].astype(jnp.float32))
    # (tile_rows, 128) -> (tile_rows/8, 8, 128): the reshape respects (8,128) tile
    # boundaries (free) and the leading-axis sum is pure VPU work hidden under the DMA.
    # The expensive cross-lane reduce happens once, on the tiny partials, in the wrapper.
    acc_ref[...] += jnp.sum(diff.reshape(-1, _SUBLANE, _LANE), axis=0)


def content_loss(input_arr, target_arr):
    """Mirrors ContentLoss.forward: returns (input, loss), loss = mean(|input - target|)."""
    assert input_arr.shape == target_arr.shape
    total = int(input_arr.size)

    x_flat = input_arr.reshape(-1)   # free: row-major contiguous reshape
    t_flat = target_arr.reshape(-1)

    itemsize = input_arr.dtype.itemsize
    sub = _SUBLANE * max(1, 4 // max(1, itemsize))   # 8 rows (32-bit), 16 (bf16), 32 (int8)
    rows = total // _LANE

    if rows < sub:
        # Tiny input: kernel launch + grid overhead dominates; XLA's fusion is optimal.
        loss = jnp.sum(jnp.abs(x_flat.astype(jnp.float32)
                               - t_flat.astype(jnp.float32))) / total
        return input_arr, loss

    target_rows = max(sub, _TARGET_TILE_BYTES // (_LANE * itemsize))
    tile_rows = min(target_rows, (rows // sub) * sub)   # full (sub,128)-aligned tile

    n_blocks = rows // tile_rows
    num_splits = _num_tensorcores()
    if num_splits > 1 and (n_blocks < num_splits or n_blocks % num_splits != 0):
        num_splits = 1
    steps = n_blocks // num_splits

    main_rows = n_blocks * tile_rows
    kernel_elems = main_rows * _LANE

    if total % _LANE == 0:
        # Zero-copy lane-dense view of the whole tensor; the kernel only touches the
        # first main_rows rows (no partial blocks, no padding, no extra HBM traffic).
        x2d = x_flat.reshape(rows, _LANE)
        t2d = t_flat.reshape(rows, _LANE)
    else:
        # TODO(synk): rare misaligned case (total % 128 != 0); the prefix slice may
        # materialize a copy of the main region since a custom call can't fuse it.
        x2d = x_flat[:kernel_elems].reshape(main_rows, _LANE)
        t2d = t_flat[:kernel_elems].reshape(main_rows, _LANE)

    # Elements not covered by full tiles (< tile_rows*128 + 128 of them): fused jnp reduce
    # straight from the original buffers.
    if kernel_elems < total:
        rem_sum = jnp.sum(jnp.abs(x_flat[kernel_elems:].astype(jnp.float32)
                                  - t_flat[kernel_elems:].astype(jnp.float32)))
    else:
        rem_sum = jnp.float32(0.0)

    in_spec = pl.BlockSpec((tile_rows, _LANE), lambda c, i: (c * steps + i, 0))
    # One (8,128) f32 partial per split; same block across the reduction axis.
    out_spec = pl.BlockSpec((None, _SUBLANE, _LANE), lambda c, i: (c, 0, 0))

    if num_splits > 1:
        # Real cross-TensorCore split (v7x): CORE_PARALLEL actually shards across cores.
        lead_sem = getattr(pltpu, "CORE_PARALLEL", "parallel")
    else:
        lead_sem = "arbitrary"

    partials = pl.pallas_call(
        _l1_partial_kernel,
        out_shape=jax.ShapeDtypeStruct((num_splits, _SUBLANE, _LANE), jnp.float32),
        grid_spec=pltpu.PrefetchScalarGridSpec(
            num_scalar_prefetch=0,
            grid=(num_splits, steps),
            in_specs=[in_spec, in_spec],
            out_specs=out_spec,
        ),
        compiler_params=pltpu.CompilerParams(
            dimension_semantics=(lead_sem, "arbitrary"),
            vmem_limit_bytes=_VMEM_LIMIT_BYTES,
        ),
        cost_estimate=pl.CostEstimate(
            flops=3 * kernel_elems,
            transcendentals=0,
            bytes_accessed=2 * kernel_elems * itemsize
            + num_splits * _SUBLANE * _LANE * 4,
        ),
    )(x2d, t2d)

    # Single cross-lane reduce + exact-mean scaling on the tiny partials array.
    loss = (jnp.sum(partials) + rem_sum) / total

    # ContentLoss.forward returns `input` unchanged; the loss is the side value.
    return input_arr, loss


if __name__ == "__main__":
    key = jax.random.PRNGKey(0)
    k1, k2, k3, k4, k5, k6 = jax.random.split(key, 6)

    # (1) Small NCHW feature map, 128-aligned total -> fully zero-copy kernel path.
    x = jax.random.normal(k1, (2, 4, 16, 16), dtype=jnp.float32)
    tgt = jax.random.normal(k2, (2, 4, 16, 16), dtype=jnp.float32)
    out, loss = content_loss(x, tgt)
    out = jax.block_until_ready(out)
    loss = jax.block_until_ready(loss)
    ref = jnp.mean(jnp.abs(x - tgt))
    assert jnp.allclose(loss, ref, rtol=1e-5, atol=1e-6), (loss, ref)
    assert jnp.array_equal(out, x)  # pass-through semantics

    # (2) Misaligned total (not a multiple of 128): kernel on full tiles + jnp remainder.
    x2 = jax.random.normal(k3, (2, 4, 17, 19), dtype=jnp.float32)
    tgt2 = jax.random.normal(k4, (2, 4, 17, 19), dtype=jnp.float32)
    out2, loss2 = content_loss(x2, tgt2)
    loss2 = jax.block_until_ready(loss2)
    ref2 = jnp.mean(jnp.abs(x2 - tgt2))
    assert jnp.allclose(loss2, ref2, rtol=1e-5, atol=1e-6), (loss2, ref2)
    assert jnp.array_equal(out2, x2)

    # (3) Tiny tensor (< one (8,128) block): exercises the plain-jnp short-circuit.
    x3 = jax.random.normal(k5, (2, 3, 7, 5), dtype=jnp.float32)
    tgt3 = jax.random.normal(k6, (2, 3, 7, 5), dtype=jnp.float32)
    out3, loss3 = content_loss(x3, tgt3)
    loss3 = jax.block_until_ready(loss3)
    ref3 = jnp.mean(jnp.abs(x3 - tgt3))
    assert jnp.allclose(loss3, ref3, rtol=1e-5, atol=1e-6), (loss3, ref3)
    assert jnp.array_equal(out3, x3)

    print("KERNEL_OK")
</pallas_src>

<mosaic_0001>
module attributes {stable_mosaic.version = 11 : i64} {
  func.func @_l1_partial_kernel(%arg0: i32, %arg1: i32, %arg2: memref<16x128xf32, #tpu.memory_space<vmem>>, %arg3: memref<16x128xf32, #tpu.memory_space<vmem>>, %arg4: memref<1x8x128xf32, #tpu.memory_space<vmem>>) attributes {dimension_semantics = [#tpu.dimension_semantics<arbitrary>, #tpu.dimension_semantics<arbitrary>], iteration_bounds = array<i64: 1, 1>, scalar_prefetch = 0 : i64, scratch_operands = 0 : i64, tpu.core_type = #tpu.core_type<tc>, window_params = [{transform_indices = @transform_0, window_bounds = array<i64: 16, 128>}, {transform_indices = @transform_1, window_bounds = array<i64: 16, 128>}, {transform_indices = @transform_2, window_bounds = array<i64: 1, 8, 128>}]} {
    %c0_i32 = arith.constant 0 : i32
    %0 = arith.cmpi eq, %arg1, %c0_i32 : i32
    %1 = arith.extui %0 : i1 to i32
    %c0_i32_0 = arith.constant 0 : i32
    %2 = arith.cmpi ne, %1, %c0_i32_0 : i32
    scf.if %2 {
      %cst_10 = arith.constant 0.000000e+00 : f32
      %15 = vector.broadcast %cst_10 : f32 to vector<8x128xf32>
      %c0_11 = arith.constant 0 : index
      %c0_12 = arith.constant 0 : index
      %c0_13 = arith.constant 0 : index
      %16 = vector.load %arg4[%c0_11, %c0_12, %c0_13] : memref<1x8x128xf32, #tpu.memory_space<vmem>>, vector<1x8x128xf32>
      %17 = vector.shape_cast %16 : vector<1x8x128xf32> to vector<8x128xf32>
      %18 = vector.shape_cast %15 : vector<8x128xf32> to vector<1x8x128xf32>
      tpu.vector_store %arg4[%c0_11, %c0_12, %c0_13], %18 {strides = array<i32>} : memref<1x8x128xf32, #tpu.memory_space<vmem>>, vector<1x8x128xf32>,
    } else {
    }
    %c0 = arith.constant 0 : index
    %c0_1 = arith.constant 0 : index
    %3 = vector.load %arg2[%c0, %c0_1] : memref<16x128xf32, #tpu.memory_space<vmem>>, vector<16x128xf32>
    %c0_2 = arith.constant 0 : index
    %c0_3 = arith.constant 0 : index
    %4 = vector.load %arg3[%c0_2, %c0_3] : memref<16x128xf32, #tpu.memory_space<vmem>>, vector<16x128xf32>
    %5 = arith.subf %3, %4 : vector<16x128xf32>
    %6 = math.absf %5 : vector<16x128xf32>
    %c0_4 = arith.constant 0 : index
    %c0_5 = arith.constant 0 : index
    %c0_6 = arith.constant 0 : index
    %7 = vector.load %arg4[%c0_4, %c0_5, %c0_6] : memref<1x8x128xf32, #tpu.memory_space<vmem>>, vector<1x8x128xf32>
    %8 = vector.shape_cast %7 : vector<1x8x128xf32> to vector<8x128xf32>
    %9 = vector.shape_cast %6 : vector<16x128xf32> to vector<2x8x128xf32>
    %cst = arith.constant dense<0.000000e+00> : vector<8x128xf32>
    %10 = vector.multi_reduction <add>, %9, %cst [0] : vector<2x8x128xf32> to vector<8x128xf32>
    %11 = arith.addf %8, %10 : vector<8x128xf32>
    %c0_7 = arith.constant 0 : index
    %c0_8 = arith.constant 0 : index
    %c0_9 = arith.constant 0 : index
    %12 = vector.load %arg4[%c0_7, %c0_8, %c0_9] : memref<1x8x128xf32, #tpu.memory_space<vmem>>, vector<1x8x128xf32>
    %13 = vector.shape_cast %12 : vector<1x8x128xf32> to vector<8x128xf32>
    %14 = vector.shape_cast %11 : vector<8x128xf32> to vector<1x8x128xf32>
    tpu.vector_store %arg4[%c0_7, %c0_8, %c0_9], %14 {strides = array<i32>} : memref<1x8x128xf32, #tpu.memory_space<vmem>>, vector<1x8x128xf32>,
    return
  }
  func.func @transform_0(%arg0: i32, %arg1: i32) -> (i32, i32) {
    %c1_i32 = arith.constant 1 : i32
    %0 = arith.muli %arg0, %c1_i32 : i32
    %1 = arith.addi %0, %arg1 : i32
    %c0_i32 = arith.constant 0 : i32
    %c0_i32_0 = arith.constant 0 : i32
    return %1, %c0_i32 : i32, i32
  }
  func.func @transform_1(%arg0: i32, %arg1: i32) -> (i32, i32) {
    %c1_i32 = arith.constant 1 : i32
    %0 = arith.muli %arg0, %c1_i32 : i32
    %1 = arith.addi %0, %arg1 : i32
    %c0_i32 = arith.constant 0 : i32
    %c0_i32_0 = arith.constant 0 : i32
    return %1, %c0_i32 : i32, i32
  }
  func.func @transform_2(%arg0: i32, %arg1: i32) -> (i32, i32, i32) {
    %c0_i32 = arith.constant 0 : i32
    %c0_i32_0 = arith.constant 0 : i32
    %c0_i32_1 = arith.constant 0 : i32
    return %arg0, %c0_i32, %c0_i32_0 : i32, i32, i32
  }
}

</mosaic_0001>

<llo_original>
// kernel: tpu_custom_call.1
$region0: #{tpu_custom_call.1}
  #allocation0 [shape = 'u32[]', space=smem, size = 0x4, offset = 0x4, fixed_abs, tag = 'smem constant byte address 0x4 - core index']
  #allocation1 [shape = 'u32[144,128]{1,0:T(1,128)}', space=vmem, size = 0x12000, scoped, tag = 'internal scratch']
  %s0 = inlined_call_operand.hbm [shape: f32[16,128], index: 0, kind: input, shape index: {}]
  %s1 = inlined_call_operand.hbm [shape: f32[16,128], index: 1, kind: input, shape index: {}]
  %s2 = inlined_call_operand.hbm [shape: f32[1,8,128], index: 2, kind: output, shape index: {}]
  %s3 = sld [smem:[#allocation0]]
  $region30: #{tpu_custom_call.1} parent=0
    _
  %s5 = ssub.s32 1, %s3
  %s6 = scalar_select 0, %s5, %s3
  $region1: #{tpu_custom_call.1} parent=0
    #allocation2 [shape = 'u8[8192]{0}', space=vmem, size = 0x2000, scoped, tag = 'input window, operand 0, single buffered']
    #allocation3 [shape = 's32[1]{0}', space=sflag, size = 0x4, scoped, tag = 'scoped memory for tpu_custom_call.1']
    #allocation4 [shape = 's32[1]{0}', space=sflag, size = 0x4, scoped, tag = 'scoped memory for tpu_custom_call.1']
    #allocation5 [shape = 'u8[8192]{0}', space=vmem, size = 0x2000, scoped, tag = 'input window, operand 1, single buffered']
    #allocation6 [shape = 's32[1]{0}', space=sflag, size = 0x4, scoped, tag = 'scoped memory for tpu_custom_call.1']
    #allocation7 [shape = 'u8[4096]{0}', space=vmem, size = 0x1000, scoped, tag = 'output window, operand 0, single buffered']
    %7 = vsyncpa [#allocation3], 0
    %8 = vsyncpa [#allocation6], 0
    %9 = vsyncpa [#allocation4], 0
    // Predicated region
    $region2: #{tpu_custom_call.1} parent=1 // pred_check
      _
    $region3: #{tpu_custom_call.1} parent=1 // pred_check_branch
      %11 = sbr.rel (0) target = $region5
    $region4: #{tpu_custom_call.1} parent=1 // pred_region
      %s12 = sadd.s32 0, 0
      %s13 = smul.u32 2, %s12
      %s15 = ssub.s32 256, 256
      %16 = vsyncadd [#allocation3], %s15
      %s17 = smul.addr %s13, 128
      %s18 = scalar_lea.hbm %s0, %s17
      %s19 = sshll.u32 [#allocation2], 4
      %s20 = int_to_ptr.vmem [resolvable:$true] %s19
      %25 = dma.hbm_to_vmem [thread:$0]  %s18, 256, %s20, [#allocation3], 128, 128, 8
    $region5: #{tpu_custom_call.1} parent=1 // pred_fallthru
      _
    // Predicated region
    $region6: #{tpu_custom_call.1} parent=1 // pred_check
      _
    $region7: #{tpu_custom_call.1} parent=1 // pred_check_branch
      %27 = sbr.rel (0) target = $region9
    $region8: #{tpu_custom_call.1} parent=1 // pred_region
      %s28 = sadd.s32 0, 0
      %s29 = smul.u32 2, %s28
      %s31 = ssub.s32 256, 256
      %32 = vsyncadd [#allocation6], %s31
      %s33 = smul.addr %s29, 128
      %s34 = scalar_lea.hbm %s1, %s33
      %s35 = sshll.u32 [#allocation5], 4
      %s36 = int_to_ptr.vmem [resolvable:$true] %s35
      %41 = dma.hbm_to_vmem [thread:$0]  %s34, 256, %s36, [#allocation6], 128, 128, 8
    $region9: #{tpu_custom_call.1} parent=1 // pred_fallthru
      _
    // Predicated region
    $region10: #{tpu_custom_call.1} parent=1 // pred_check
      _
    $region11: #{tpu_custom_call.1} parent=1 // pred_check_branch
      %43 = sbr.rel (0) target = $region13
    $region12: #{tpu_custom_call.1} parent=1 // pred_region
      %44 = dma.done [#allocation3], 256
    $region13: #{tpu_custom_call.1} parent=1 // pred_fallthru
      _
    // Predicated region
    $region14: #{tpu_custom_call.1} parent=1 // pred_check
      _
    $region15: #{tpu_custom_call.1} parent=1 // pred_check_branch
      %46 = sbr.rel (0) target = $region17
    $region16: #{tpu_custom_call.1} parent=1 // pred_region
      %47 = dma.done [#allocation6], 256
    $region17: #{tpu_custom_call.1} parent=1 // pred_fallthru
      _
    %s48 = sadd.s32 0, 0
    %s49 = smul.u32 2, %s48
    %s50 = sadd.s32 0, 0
    %s51 = smul.u32 2, %s50
    %p52 = scmp.eq.s32.totalorder 0, 0
    // Predicated region
    $region18: #{tpu_custom_call.1} parent=1 // pred_check
      %p53 = pneg %p52
    $region19: #{tpu_custom_call.1} parent=1 // pred_check_branch
      %55 = sbr.rel (%p53) target = $region21
    $region20: #{tpu_custom_call.1} parent=1 // pred_region
      %56 = vst [vmem:[#allocation7] sm:$0xff] 0.0
    $region21: #{tpu_custom_call.1} parent=1 // pred_fallthru
      _
    %v57 = vld [vmem:[#allocation2] sm:$0xff]
    %v58 = vld [vmem:[#allocation2 + $0x8] sm:$0xff]
    %v59 = vld [vmem:[#allocation5] sm:$0xff]
    %v60 = vld [vmem:[#allocation5 + $0x8] sm:$0xff]
    %v61 = vsub.f32 %v57, %v59
    %v62 = vsub.f32 %v58, %v60
    %v63 = vand.u32 2147483647, %v61
    %v64 = vand.u32 2147483647, %v62
    %v65 = vld [vmem:[#allocation7] sm:$0xff]
    %v66 = vadd.f32 %v63, %v64
    %v67 = vadd.f32 %v65, %v66
    %68 = vst [vmem:[#allocation7] sm:$0xff] %v67
    // Predicated region
    $region22: #{tpu_custom_call.1} parent=1 // pred_check
      _
    $region23: #{tpu_custom_call.1} parent=1 // pred_check_branch
      %70 = sbr.rel (0) target = $region25
    $region24: #{tpu_custom_call.1} parent=1 // pred_region
      %s72 = ssub.s32 128, 128
      %73 = vsyncadd [#allocation4], %s72
      %s75 = sshll.u32 [#allocation7], 4
      %s76 = int_to_ptr.vmem [resolvable:$true] %s75
      %78 = dma.vmem_to_hbm [thread:$0]  %s76, 128, %s2, [#allocation4]
    $region25: #{tpu_custom_call.1} parent=1 // pred_fallthru
      _
    // Predicated region
    $region26: #{tpu_custom_call.1} parent=1 // pred_check
      _
    $region27: #{tpu_custom_call.1} parent=1 // pred_check_branch
      %80 = sbr.rel (0) target = $region29
    $region28: #{tpu_custom_call.1} parent=1 // pred_region
      %81 = dma.done [#allocation4], 128
    $region29: #{tpu_custom_call.1} parent=1 // pred_fallthru
      _
    %82 = vsyncpa [#allocation3], 1
    %83 = vsyncpa [#allocation6], 1
    %84 = vsyncpa [#allocation4], 1

</llo_original>
